<compile_context>
chip_gen: v7x
topology: tpu7x:2x2x1
jax: 0.10.0
libtpu: 0.0.40
codegen_flags: <defaults>
</compile_context>

<pallas_src>
import jax
import jax.numpy as jnp
from jax import lax
from jax.experimental import pallas as pl
from jax.experimental.pallas import tpu as pltpu


_HBM_RING = 16                 # outstanding row DMAs in the HBM-gather path (power of two)
_MAX_TOKEN_BLOCK = 512         # max tokens gathered per grid step
_MAX_FLAT_TOKENS = 64 * 1024   # wrapper-level chunking keeps SMEM-prefetched ids small
_TAKE_TABLE_BYTES_MAX = 1 << 20  # only use whole-table jnp.take for small tables


def _round_up(x: int, m: int) -> int:
    return (x + m - 1) // m * m


def _vmem_limit_bytes() -> int:
    # v5e/v6e: 128 MiB physical VMEM, v7x: 64 MiB. Raise the scoped limit above
    # the 16/32 MiB defaults but stay below physical capacity.
    try:
        cap = int(pltpu.get_tpu_info().vmem_capacity_bytes)
    except Exception:
        cap = 64 * 1024 * 1024     # conservative (v7x-sized) fallback
    return int(min(0.85 * cap, 100 * 1024 * 1024))


# ----------------------------------------------------------------------------
# Kernels
# ----------------------------------------------------------------------------

def _vmem_take_kernel(ids_ref, table_ref, out_ref):
    """Vectorized gather: whole tile in one dynamic-gather, one dense store."""
    idx = ids_ref[...]                       # (t_block,) int32, VMEM
    out_ref[...] = jnp.take(table_ref[...], idx, axis=0, mode="promise_in_bounds")


def _make_vmem_rowcopy_kernel(group: int):
    """Fallback gather: `group` (= sublane packing) rows per dense store.

    Per group: `group` dynamic single-row loads from the VMEM table are
    concatenated and written with ONE sublane-aligned dense store, instead of
    `group` masked single-sublane stores (the measured ~4.5x store lever,
    biggest win on v5e's single vector-store slot).
    """

    def kernel(ids_ref, table_ref, out_ref):
        t_block = out_ref.shape[0]
        base = pl.program_id(0) * t_block
        n_groups = t_block // group

        def body(g, carry):
            start = pl.multiple_of(g * group, group)
            rows = [
                table_ref[pl.ds(ids_ref[base + start + j], 1), :]
                for j in range(group)
            ]
            out_ref[pl.ds(start, group), :] = jnp.concatenate(rows, axis=0)
            return carry

        lax.fori_loop(0, n_groups, body, 0, unroll=2)

    return kernel


def _make_hbm_gather_kernel(direct: bool, n_ring: int):
    """Table stays in HBM; one row DMA per token through an n_ring-deep ring.

    direct=True : rows are DMA'd straight into the output tile (no VMEM bounce
                  buffer; the kernel is pure DMA issue + semaphore waits).
    direct=False: rows land in a VMEM row buffer and are re-stored (fallback).
    """

    def kernel(ids_ref, table_ref, out_ref, *scratch):
        if direct:
            (sem_ref,) = scratch
            rowbuf_ref = None
        else:
            rowbuf_ref, sem_ref = scratch

        t_block = out_ref.shape[0]
        base = pl.program_id(0) * t_block
        n_prime = min(n_ring, t_block)        # static

        def start_row(t, tok, slot):
            src = table_ref.at[pl.ds(tok, 1), :]
            dst = out_ref.at[pl.ds(t, 1), :] if direct else rowbuf_ref.at[slot]
            pltpu.make_async_copy(src, dst, sem_ref.at[slot]).start()

        def wait_row(slot):
            # All row copies have identical byte counts, so a dummy descriptor
            # (row 0 on both sides) is fine for the wait.
            src = table_ref.at[pl.ds(0, 1), :]
            dst = out_ref.at[pl.ds(0, 1), :] if direct else rowbuf_ref.at[slot]
            pltpu.make_async_copy(src, dst, sem_ref.at[slot]).wait()

        # Prime the ring with up to n_prime outstanding row fetches.
        def prime(t, carry):
            start_row(t, ids_ref[base + t], t)
            return carry

        lax.fori_loop(0, n_prime, prime, 0, unroll=True)

        # Steady state: wait for row t, (optionally) store it into the dense
        # output tile, then reuse the freed slot to prefetch row t + n_prime.
        def body(t, carry):
            slot = t % n_ring
            nxt = t + n_prime
            # Hoist the scalar id read above the DMA wait: .wait() breaks SMEM
            # store->load forwarding. Clamp keeps the SMEM read in-bounds; the
            # value is only consumed when nxt < t_block.
            tok_nxt = ids_ref[base + jnp.minimum(nxt, t_block - 1)]
            wait_row(slot)
            if not direct:
                out_ref[pl.ds(t, 1), :] = rowbuf_ref[slot]

            @pl.when(nxt < t_block)
            def _():
                start_row(nxt, tok_nxt, slot)

            return carry

        # All rows are waited on inside this loop, so every DMA into out_ref is
        # complete before the automatic output writeback runs.
        lax.fori_loop(0, t_block, body, 0, unroll=4)

    return kernel


# ----------------------------------------------------------------------------
# pallas_call builders
# ----------------------------------------------------------------------------

def _call_vmem_path(ids_flat, table, *, t_block, use_take, single_buf_table,
                    vmem_limit):
    n_padded = int(ids_flat.shape[0])
    n_tiles = n_padded // t_block
    vocab, d_model = table.shape
    dtype = table.dtype
    itemsize = jnp.dtype(dtype).itemsize

    if single_buf_table:
        # The table is fetched once (constant index map); double-buffering it
        # only wastes VMEM.
        table_spec = pl.BlockSpec((vocab, d_model), lambda *_: (0, 0),
                                  pipeline_mode=pl.Buffered(1))
    else:
        table_spec = pl.BlockSpec((vocab, d_model), lambda *_: (0, 0))

    out_spec_shape = (t_block, d_model)
    table_bytes = vocab * d_model * itemsize
    bytes_accessed = table_bytes + n_padded * 4 + n_padded * d_model * itemsize

    if use_take:
        kernel = _vmem_take_kernel
        grid_spec = pl.GridSpec(
            grid=(n_tiles,),
            in_specs=[
                pl.BlockSpec((t_block,), lambda i: (i,)),       # ids tile (VMEM)
                table_spec,                                     # whole table (VMEM)
            ],
            out_specs=pl.BlockSpec(out_spec_shape, lambda i: (i, 0)),
        )
    else:
        group = max(8, 32 // itemsize)        # sublane packing for table dtype
        kernel = _make_vmem_rowcopy_kernel(group)
        grid_spec = pltpu.PrefetchScalarGridSpec(
            num_scalar_prefetch=1,            # ids -> SMEM for scalar row reads
            grid=(n_tiles,),
            in_specs=[table_spec],
            out_specs=pl.BlockSpec(out_spec_shape, lambda i, ids: (i, 0)),
        )

    return pl.pallas_call(
        kernel,
        out_shape=jax.ShapeDtypeStruct((n_padded, d_model), dtype),
        grid_spec=grid_spec,
        compiler_params=pltpu.CompilerParams(
            # Token tiles are independent -> megacore-parallel on v7x. Note:
            # with a constant-index table spec each TensorCore streams its own
            # table copy from HBM; usually worth it once n_tokens is large.
            dimension_semantics=("parallel",),
            vmem_limit_bytes=vmem_limit,
        ),
        cost_estimate=pl.CostEstimate(
            flops=0, transcendentals=0, bytes_accessed=int(bytes_accessed)),
    )(ids_flat, table)


def _call_hbm_path(ids_flat, table, *, t_block, direct, vmem_limit):
    n_padded = int(ids_flat.shape[0])
    n_tiles = n_padded // t_block
    vocab, d_model = table.shape
    dtype = table.dtype
    itemsize = jnp.dtype(dtype).itemsize

    scratch = [pltpu.SemaphoreType.DMA((_HBM_RING,))]
    if not direct:
        scratch = [pltpu.VMEM((_HBM_RING, 1, d_model), dtype)] + scratch

    grid_spec = pltpu.PrefetchScalarGridSpec(
        num_scalar_prefetch=1,                        # ids -> SMEM
        grid=(n_tiles,),
        in_specs=[pl.BlockSpec(memory_space=pl.ANY)],  # raw HBM table ref
        out_specs=pl.BlockSpec((t_block, d_model), lambda i, ids: (i, 0)),
        scratch_shapes=scratch,
    )
    bytes_accessed = n_padded * 4 + 2 * n_padded * d_model * itemsize

    return pl.pallas_call(
        _make_hbm_gather_kernel(direct, _HBM_RING),
        out_shape=jax.ShapeDtypeStruct((n_padded, d_model), dtype),
        grid_spec=grid_spec,
        compiler_params=pltpu.CompilerParams(
            dimension_semantics=("parallel",),
            vmem_limit_bytes=vmem_limit,
        ),
        cost_estimate=pl.CostEstimate(
            flops=0, transcendentals=0, bytes_accessed=int(bytes_accessed)),
    )(ids_flat, table)


# ----------------------------------------------------------------------------
# One-time cached feature probes (tiny compile + numerical check); anything
# unsupported by the installed Mosaic silently falls back to the proven path.
# ----------------------------------------------------------------------------

_PROBE_CACHE: dict = {}


def _probe(name, fn) -> bool:
    if name not in _PROBE_CACHE:
        try:
            _PROBE_CACHE[name] = bool(fn())
        except Exception:
            _PROBE_CACHE[name] = False
    return _PROBE_CACHE[name]


def _probe_inputs():
    vocab, d_model, n = 16, 128, 8
    table = (jnp.arange(vocab * d_model, dtype=jnp.float32)
             .reshape(vocab, d_model))
    ids = jnp.array([3, 0, 15, 7, 11, 2, 9, 4], dtype=jnp.int32)
    return table, ids, n


def _probe_take():
    table, ids, n = _probe_inputs()
    out = _call_vmem_path(ids, table, t_block=n, use_take=True,
                          single_buf_table=False, vmem_limit=_vmem_limit_bytes())
    return jnp.array_equal(jax.block_until_ready(out), table[ids])


def _probe_single_buf_table():
    table, ids, n = _probe_inputs()
    out = _call_vmem_path(ids, table, t_block=n, use_take=False,
                          single_buf_table=True, vmem_limit=_vmem_limit_bytes())
    return jnp.array_equal(jax.block_until_ready(out), table[ids])


def _probe_hbm_direct():
    table, ids, n = _probe_inputs()
    out = _call_hbm_path(ids, table, t_block=n, direct=True,
                         vmem_limit=_vmem_limit_bytes())
    return jnp.array_equal(jax.block_until_ready(out), table[ids])


# ----------------------------------------------------------------------------
# Public forward
# ----------------------------------------------------------------------------

def embedding_forward(token_ids: jax.Array, embedding_table: jax.Array,
                      *, force_hbm_gather: bool = False) -> jax.Array:
    """Pallas equivalent of `embedding_table[token_ids]`."""
    vocab_size, d_model = embedding_table.shape
    dtype = embedding_table.dtype
    itemsize = jnp.dtype(dtype).itemsize

    orig_shape = tuple(token_ids.shape)
    ids_flat = jnp.asarray(token_ids).reshape(-1).astype(jnp.int32)
    # Clamp so an out-of-range id can never drive an out-of-bounds access.
    # (PyTorch's nn.Embedding would raise instead.)
    ids_flat = jnp.clip(ids_flat, 0, vocab_size - 1)
    n_tokens = int(ids_flat.shape[0])

    if n_tokens == 0:
        return jnp.zeros((*orig_shape, d_model), dtype)

    # Chunk very long flattened sequences so SMEM-prefetched ids stay small
    # (1-D SMEM arrays pad to next_pow2(4N) bytes).
    if n_tokens > _MAX_FLAT_TOKENS:
        chunks = [
            embedding_forward(ids_flat[s:s + _MAX_FLAT_TOKENS], embedding_table,
                              force_hbm_gather=force_hbm_gather)
            for s in range(0, n_tokens, _MAX_FLAT_TOKENS)
        ]
        return jnp.concatenate(chunks, axis=0).reshape(*orig_shape, d_model)

    vmem_limit = _vmem_limit_bytes()

    # ---- token-tile size -------------------------------------------------
    # Sublane packing for the table dtype: 8 (f32) / 16 (bf16) / 32 (int8).
    sublane = max(8, 32 // itemsize)
    full = _round_up(n_tokens, sublane)
    # Clamp so the double-buffered output tile fits comfortably in VMEM
    # (matters for very large d_model, especially on v7x's 64 MiB VMEM).
    by_vmem = (vmem_limit // 4) // max(1, 2 * d_model * itemsize)
    cap = max(sublane, min(_MAX_TOKEN_BLOCK, by_vmem))
    if full <= cap:
        t_block = full                         # single tile == full array
    elif cap >= 128:
        t_block = (cap // 128) * 128           # lane-friendly multi-tile block
    else:
        t_block = (cap // sublane) * sublane
    n_padded = _round_up(n_tokens, t_block)
    if n_padded != n_tokens:
        ids_flat = jnp.pad(ids_flat, (0, n_padded - n_tokens))
    n_tiles = n_padded // t_block

    # ---- path selection ----------------------------------------------------
    single_buf_ok = _probe("single_buf_table", _probe_single_buf_table)
    table_bytes = vocab_size * d_model * itemsize
    out_tile_bytes = t_block * d_model * itemsize
    table_mult = 1 if single_buf_ok else 2
    vmem_need = (table_mult * table_bytes + 2 * out_tile_bytes
                 + 2 * t_block * 4 + (1 << 20))
    use_vmem_table = (not force_hbm_gather) and (vmem_need <= (3 * vmem_limit) // 4)

    if use_vmem_table:
        use_take = (
            table_bytes <= _TAKE_TABLE_BYTES_MAX
            and (n_tiles == 1 or t_block % 128 == 0)
            and _probe("vectorized_take", _probe_take)
        )
        out_flat = _call_vmem_path(
            ids_flat, embedding_table, t_block=t_block, use_take=use_take,
            single_buf_table=single_buf_ok, vmem_limit=vmem_limit)
    else:
        direct = _probe("hbm_direct_dma", _probe_hbm_direct)
        out_flat = _call_hbm_path(
            ids_flat, embedding_table, t_block=t_block, direct=direct,
            vmem_limit=vmem_limit)

    out = out_flat[:n_tokens]
    return out.reshape(*orig_shape, d_model)


def init_embedding_table(key, num_embeddings: int, embedding_dim: int,
                         dtype=jnp.float32) -> jax.Array:
    # torch.nn.init.trunc_normal_(mean=0, std=1, a=-3, b=3) equivalent.
    return jax.random.truncated_normal(
        key, lower=-3.0, upper=3.0, shape=(num_embeddings, embedding_dim)
    ).astype(dtype)


if __name__ == "__main__":
    key = jax.random.PRNGKey(0)
    k_emb, k_ids = jax.random.split(key)

    num_embeddings = 64      # vocab_size
    embedding_dim = 128      # d_model (lane-aligned)
    batch, seq = 2, 8

    embedding_table = init_embedding_table(k_emb, num_embeddings, embedding_dim)
    token_ids = jax.random.randint(
        k_ids, shape=(batch, seq), minval=0, maxval=num_embeddings, dtype=jnp.int32
    )

    ref = embedding_table[token_ids]

    # Path 1: small table -> VMEM-resident-table path (chosen automatically;
    # vectorized gather if supported, batched dense-store row-copy otherwise).
    out_vmem = jax.block_until_ready(embedding_forward(token_ids, embedding_table))
    assert out_vmem.shape == (batch, seq, embedding_dim)
    assert out_vmem.dtype == embedding_table.dtype
    assert jnp.array_equal(out_vmem, ref), "VMEM-resident-table path mismatch"

    # Path 2: force the large-table HBM row-gather path on the same inputs.
    out_hbm = jax.block_until_ready(
        embedding_forward(token_ids, embedding_table, force_hbm_gather=True)
    )
    assert jnp.array_equal(out_hbm, ref), "HBM row-gather path mismatch"

    print("KERNEL_OK")
</pallas_src>

<mosaic_0001>
module attributes {stable_mosaic.version = 11 : i64} {
  func.func @kernel(%arg0: i32, %arg1: memref<16xi32, #tpu.memory_space<smem>>, %arg2: memref<64x128xf32, #tpu.memory_space<vmem>>, %arg3: memref<16x128xf32, #tpu.memory_space<vmem>>) attributes {dimension_semantics = [#tpu.dimension_semantics<parallel>], iteration_bounds = array<i64: 1>, scalar_prefetch = 1 : i64, scratch_operands = 0 : i64, tpu.core_type = #tpu.core_type<tc>, window_params = [{pipeline_mode = #tpu.pipeline_mode<synchronous>, transform_indices = @transform_0, window_bounds = array<i64: 64, 128>}, {transform_indices = @transform_1, window_bounds = array<i64: 16, 128>}]} {
    %c16_i32 = arith.constant 16 : i32
    %0 = arith.muli %arg0, %c16_i32 : i32
    %c0_i32 = arith.constant 0 : i32
    %c8_i32 = arith.constant 8 : i32
    %1 = arith.muli %c0_i32, %c8_i32 : i32
    %2 = tpu.assume_multiple %1, 8 : i32
    %3 = arith.addi %0, %2 : i32
    %c0_i32_0 = arith.constant 0 : i32
    %4 = arith.addi %3, %c0_i32_0 : i32
    %5 = arith.index_cast %4 : i32 to index
    %6 = memref.load %arg1[%5] : memref<16xi32, #tpu.memory_space<smem>>
    %7 = arith.index_cast %6 : i32 to index
    %c0 = arith.constant 0 : index
    %8 = vector.load %arg2[%7, %c0] : memref<64x128xf32, #tpu.memory_space<vmem>>, vector<1x128xf32>
    %9 = arith.addi %0, %2 : i32
    %c1_i32 = arith.constant 1 : i32
    %10 = arith.addi %9, %c1_i32 : i32
    %11 = arith.index_cast %10 : i32 to index
    %12 = memref.load %arg1[%11] : memref<16xi32, #tpu.memory_space<smem>>
    %13 = arith.index_cast %12 : i32 to index
    %c0_1 = arith.constant 0 : index
    %14 = vector.load %arg2[%13, %c0_1] : memref<64x128xf32, #tpu.memory_space<vmem>>, vector<1x128xf32>
    %15 = arith.addi %0, %2 : i32
    %c2_i32 = arith.constant 2 : i32
    %16 = arith.addi %15, %c2_i32 : i32
    %17 = arith.index_cast %16 : i32 to index
    %18 = memref.load %arg1[%17] : memref<16xi32, #tpu.memory_space<smem>>
    %19 = arith.index_cast %18 : i32 to index
    %c0_2 = arith.constant 0 : index
    %20 = vector.load %arg2[%19, %c0_2] : memref<64x128xf32, #tpu.memory_space<vmem>>, vector<1x128xf32>
    %21 = arith.addi %0, %2 : i32
    %c3_i32 = arith.constant 3 : i32
    %22 = arith.addi %21, %c3_i32 : i32
    %23 = arith.index_cast %22 : i32 to index
    %24 = memref.load %arg1[%23] : memref<16xi32, #tpu.memory_space<smem>>
    %25 = arith.index_cast %24 : i32 to index
    %c0_3 = arith.constant 0 : index
    %26 = vector.load %arg2[%25, %c0_3] : memref<64x128xf32, #tpu.memory_space<vmem>>, vector<1x128xf32>
    %27 = arith.addi %0, %2 : i32
    %c4_i32 = arith.constant 4 : i32
    %28 = arith.addi %27, %c4_i32 : i32
    %29 = arith.index_cast %28 : i32 to index
    %30 = memref.load %arg1[%29] : memref<16xi32, #tpu.memory_space<smem>>
    %31 = arith.index_cast %30 : i32 to index
    %c0_4 = arith.constant 0 : index
    %32 = vector.load %arg2[%31, %c0_4] : memref<64x128xf32, #tpu.memory_space<vmem>>, vector<1x128xf32>
    %33 = arith.addi %0, %2 : i32
    %c5_i32 = arith.constant 5 : i32
    %34 = arith.addi %33, %c5_i32 : i32
    %35 = arith.index_cast %34 : i32 to index
    %36 = memref.load %arg1[%35] : memref<16xi32, #tpu.memory_space<smem>>
    %37 = arith.index_cast %36 : i32 to index
    %c0_5 = arith.constant 0 : index
    %38 = vector.load %arg2[%37, %c0_5] : memref<64x128xf32, #tpu.memory_space<vmem>>, vector<1x128xf32>
    %39 = arith.addi %0, %2 : i32
    %c6_i32 = arith.constant 6 : i32
    %40 = arith.addi %39, %c6_i32 : i32
    %41 = arith.index_cast %40 : i32 to index
    %42 = memref.load %arg1[%41] : memref<16xi32, #tpu.memory_space<smem>>
    %43 = arith.index_cast %42 : i32 to index
    %c0_6 = arith.constant 0 : index
    %44 = vector.load %arg2[%43, %c0_6] : memref<64x128xf32, #tpu.memory_space<vmem>>, vector<1x128xf32>
    %45 = arith.addi %0, %2 : i32
    %c7_i32 = arith.constant 7 : i32
    %46 = arith.addi %45, %c7_i32 : i32
    %47 = arith.index_cast %46 : i32 to index
    %48 = memref.load %arg1[%47] : memref<16xi32, #tpu.memory_space<smem>>
    %49 = arith.index_cast %48 : i32 to index
    %c0_7 = arith.constant 0 : index
    %50 = vector.load %arg2[%49, %c0_7] : memref<64x128xf32, #tpu.memory_space<vmem>>, vector<1x128xf32>
    %51 = tpu.concatenate %8, %14, %20, %26, %32, %38, %44, %50 in 0 : vector<1x128xf32>, vector<1x128xf32>, vector<1x128xf32>, vector<1x128xf32>, vector<1x128xf32>, vector<1x128xf32>, vector<1x128xf32>, vector<1x128xf32> -> vector<8x128xf32>
    %52 = arith.index_cast %2 : i32 to index
    %c0_8 = arith.constant 0 : index
    %53 = vector.load %arg3[%52, %c0_8] : memref<16x128xf32, #tpu.memory_space<vmem>>, vector<8x128xf32>
    tpu.vector_store %arg3[%52, %c0_8], %51 {strides = array<i32>} : memref<16x128xf32, #tpu.memory_space<vmem>>, vector<8x128xf32>,
    %c1_i32_9 = arith.constant 1 : i32
    %c8_i32_10 = arith.constant 8 : i32
    %54 = arith.muli %c1_i32_9, %c8_i32_10 : i32
    %55 = tpu.assume_multiple %54, 8 : i32
    %56 = arith.addi %0, %55 : i32
    %c0_i32_11 = arith.constant 0 : i32
    %57 = arith.addi %56, %c0_i32_11 : i32
    %58 = arith.index_cast %57 : i32 to index
    %59 = memref.load %arg1[%58] : memref<16xi32, #tpu.memory_space<smem>>
    %60 = arith.index_cast %59 : i32 to index
    %c0_12 = arith.constant 0 : index
    %61 = vector.load %arg2[%60, %c0_12] : memref<64x128xf32, #tpu.memory_space<vmem>>, vector<1x128xf32>
    %62 = arith.addi %0, %55 : i32
    %c1_i32_13 = arith.constant 1 : i32
    %63 = arith.addi %62, %c1_i32_13 : i32
    %64 = arith.index_cast %63 : i32 to index
    %65 = memref.load %arg1[%64] : memref<16xi32, #tpu.memory_space<smem>>
    %66 = arith.index_cast %65 : i32 to index
    %c0_14 = arith.constant 0 : index
    %67 = vector.load %arg2[%66, %c0_14] : memref<64x128xf32, #tpu.memory_space<vmem>>, vector<1x128xf32>
    %68 = arith.addi %0, %55 : i32
    %c2_i32_15 = arith.constant 2 : i32
    %69 = arith.addi %68, %c2_i32_15 : i32
    %70 = arith.index_cast %69 : i32 to index
    %71 = memref.load %arg1[%70] : memref<16xi32, #tpu.memory_space<smem>>
    %72 = arith.index_cast %71 : i32 to index
    %c0_16 = arith.constant 0 : index
    %73 = vector.load %arg2[%72, %c0_16] : memref<64x128xf32, #tpu.memory_space<vmem>>, vector<1x128xf32>
    %74 = arith.addi %0, %55 : i32
    %c3_i32_17 = arith.constant 3 : i32
    %75 = arith.addi %74, %c3_i32_17 : i32
    %76 = arith.index_cast %75 : i32 to index
    %77 = memref.load %arg1[%76] : memref<16xi32, #tpu.memory_space<smem>>
    %78 = arith.index_cast %77 : i32 to index
    %c0_18 = arith.constant 0 : index
    %79 = vector.load %arg2[%78, %c0_18] : memref<64x128xf32, #tpu.memory_space<vmem>>, vector<1x128xf32>
    %80 = arith.addi %0, %55 : i32
    %c4_i32_19 = arith.constant 4 : i32
    %81 = arith.addi %80, %c4_i32_19 : i32
    %82 = arith.index_cast %81 : i32 to index
    %83 = memref.load %arg1[%82] : memref<16xi32, #tpu.memory_space<smem>>
    %84 = arith.index_cast %83 : i32 to index
    %c0_20 = arith.constant 0 : index
    %85 = vector.load %arg2[%84, %c0_20] : memref<64x128xf32, #tpu.memory_space<vmem>>, vector<1x128xf32>
    %86 = arith.addi %0, %55 : i32
    %c5_i32_21 = arith.constant 5 : i32
    %87 = arith.addi %86, %c5_i32_21 : i32
    %88 = arith.index_cast %87 : i32 to index
    %89 = memref.load %arg1[%88] : memref<16xi32, #tpu.memory_space<smem>>
    %90 = arith.index_cast %89 : i32 to index
    %c0_22 = arith.constant 0 : index
    %91 = vector.load %arg2[%90, %c0_22] : memref<64x128xf32, #tpu.memory_space<vmem>>, vector<1x128xf32>
    %92 = arith.addi %0, %55 : i32
    %c6_i32_23 = arith.constant 6 : i32
    %93 = arith.addi %92, %c6_i32_23 : i32
    %94 = arith.index_cast %93 : i32 to index
    %95 = memref.load %arg1[%94] : memref<16xi32, #tpu.memory_space<smem>>
    %96 = arith.index_cast %95 : i32 to index
    %c0_24 = arith.constant 0 : index
    %97 = vector.load %arg2[%96, %c0_24] : memref<64x128xf32, #tpu.memory_space<vmem>>, vector<1x128xf32>
    %98 = arith.addi %0, %55 : i32
    %c7_i32_25 = arith.constant 7 : i32
    %99 = arith.addi %98, %c7_i32_25 : i32
    %100 = arith.index_cast %99 : i32 to index
    %101 = memref.load %arg1[%100] : memref<16xi32, #tpu.memory_space<smem>>
    %102 = arith.index_cast %101 : i32 to index
    %c0_26 = arith.constant 0 : index
    %103 = vector.load %arg2[%102, %c0_26] : memref<64x128xf32, #tpu.memory_space<vmem>>, vector<1x128xf32>
    %104 = tpu.concatenate %61, %67, %73, %79, %85, %91, %97, %103 in 0 : vector<1x128xf32>, vector<1x128xf32>, vector<1x128xf32>, vector<1x128xf32>, vector<1x128xf32>, vector<1x128xf32>, vector<1x128xf32>, vector<1x128xf32> -> vector<8x128xf32>
    %105 = arith.index_cast %55 : i32 to index
    %c0_27 = arith.constant 0 : index
    %106 = vector.load %arg3[%105, %c0_27] : memref<16x128xf32, #tpu.memory_space<vmem>>, vector<8x128xf32>
    tpu.vector_store %arg3[%105, %c0_27], %104 {strides = array<i32>} : memref<16x128xf32, #tpu.memory_space<vmem>>, vector<8x128xf32>,
    %c2_i32_28 = arith.constant 2 : i32
    return
  }
  func.func @transform_0(%arg0: i32, %arg1: memref<16xi32, #tpu.memory_space<smem>>) -> (i32, i32) {
    %c0_i32 = arith.constant 0 : i32
    %c0_i32_0 = arith.constant 0 : i32
    %c0_i32_1 = arith.constant 0 : i32
    return %c0_i32, %c0_i32_0 : i32, i32
  }
  func.func @transform_1(%arg0: i32, %arg1: memref<16xi32, #tpu.memory_space<smem>>) -> (i32, i32) {
    %c0_i32 = arith.constant 0 : i32
    %c0_i32_0 = arith.constant 0 : i32
    return %arg0, %c0_i32 : i32, i32
  }
}

</mosaic_0001>

<llo_original>
// kernel: tpu_custom_call.1
$region0: #{tpu_custom_call.1}
  #allocation0 [shape = 'u32[]', space=smem, size = 0x4, offset = 0x4, fixed_abs, tag = 'smem constant byte address 0x4 - core index']
  #allocation1 [shape = 'u32[144,128]{1,0:T(1,128)}', space=vmem, size = 0x12000, scoped, tag = 'internal scratch']
  #allocation2 [shape = 's32[1]{0}', space=sflag, size = 0x4, scoped, tag = 'scoped memory for tpu_custom_call.1']
  #allocation3 [shape = 'u8[512]{0}', space=smem, size = 0x200, scoped, tag = 'prefetched SMEM operand 0']
  %s0 = inlined_call_operand.hbm [shape: s32[16], index: 0, kind: input, shape index: {}]
  %s1 = inlined_call_operand.hbm [shape: f32[64,128], index: 1, kind: input, shape index: {}]
  %s2 = inlined_call_operand.hbm [shape: f32[16,128], index: 2, kind: output, shape index: {}]
  %s3 = sld [smem:[#allocation0]]
  $region18: #{tpu_custom_call.1} parent=0
    _
  %s5 = ssub.s32 1, %s3
  %s6 = scalar_select 0, %s5, %s3
  %8 = dma.hbm_to_smem %s0, 16, [#allocation3], [#allocation2]
  %9 = dma.done [#allocation2], 16
  %10 = sfence
  $region1: #{tpu_custom_call.1} parent=0
    #allocation4 [shape = 'u8[32768]{0}', space=vmem, size = 0x8000, scoped, tag = 'input window, operand 1, single buffered']
    #allocation5 [shape = 's32[1]{0}', space=sflag, size = 0x4, scoped, tag = 'scoped memory for tpu_custom_call.1']
    #allocation6 [shape = 's32[1]{0}', space=sflag, size = 0x4, scoped, tag = 'scoped memory for tpu_custom_call.1']
    #allocation7 [shape = 'u8[8192]{0}', space=vmem, size = 0x2000, scoped, tag = 'output window, operand 0, single buffered']
    %11 = vsyncpa [#allocation5], 0
    %12 = vsyncpa [#allocation6], 0
    // Predicated region
    $region2: #{tpu_custom_call.1} parent=1 // pred_check
      _
    $region3: #{tpu_custom_call.1} parent=1 // pred_check_branch
      %14 = sbr.rel (0) target = $region5
    $region4: #{tpu_custom_call.1} parent=1 // pred_region
      %s16 = ssub.s32 1024, 1024
      %17 = vsyncadd [#allocation5], %s16
      %s18 = sshll.u32 [#allocation4], 4
      %s19 = int_to_ptr.vmem [resolvable:$true] %s18
      %24 = dma.hbm_to_vmem [thread:$0]  %s1, 1024, %s19, [#allocation5], 128, 128, 8
    $region5: #{tpu_custom_call.1} parent=1 // pred_fallthru
      _
    // Predicated region
    $region6: #{tpu_custom_call.1} parent=1 // pred_check
      _
    $region7: #{tpu_custom_call.1} parent=1 // pred_check_branch
      %26 = sbr.rel (0) target = $region9
    $region8: #{tpu_custom_call.1} parent=1 // pred_region
      %27 = dma.done [#allocation5], 1024
    $region9: #{tpu_custom_call.1} parent=1 // pred_fallthru
      _
    %s28 = smul.u32 0, 16
    %s29 = sadd.s32 %s28, 0
    %s30 = sld [smem:[#allocation3 + %s29]]
    %s31 = scalar_lea.vmem [#allocation4], %s30
    %v32 = vld [vmem:[%s31] sm:$0x1]
    %s33 = sadd.s32 %s29, 1
    %s34 = sld [smem:[#allocation3 + %s33]]
    %s35 = scalar_lea.vmem [#allocation4], %s34
    %v36 = vld [vmem:[%s35] sm:$0x1]
    %s37 = sadd.s32 %s29, 2
    %s38 = sld [smem:[#allocation3 + %s37]]
    %s39 = scalar_lea.vmem [#allocation4], %s38
    %v40 = vld [vmem:[%s39] sm:$0x1]
    %s41 = sadd.s32 %s29, 3
    %s42 = sld [smem:[#allocation3 + %s41]]
    %s43 = scalar_lea.vmem [#allocation4], %s42
    %v44 = vld [vmem:[%s43] sm:$0x1]
    %s45 = sadd.s32 %s29, 4
    %s46 = sld [smem:[#allocation3 + %s45]]
    %s47 = scalar_lea.vmem [#allocation4], %s46
    %v48 = vld [vmem:[%s47] sm:$0x1]
    %s49 = sadd.s32 %s29, 5
    %s50 = sld [smem:[#allocation3 + %s49]]
    %s51 = scalar_lea.vmem [#allocation4], %s50
    %v52 = vld [vmem:[%s51] sm:$0x1]
    %s53 = sadd.s32 %s29, 6
    %s54 = sld [smem:[#allocation3 + %s53]]
    %s55 = scalar_lea.vmem [#allocation4], %s54
    %v56 = vld [vmem:[%s55] sm:$0x1]
    %s57 = sadd.s32 %s29, 7
    %s58 = sld [smem:[#allocation3 + %s57]]
    %s59 = scalar_lea.vmem [#allocation4], %s58
    %v60 = vld [vmem:[%s59] sm:$0x1]
    %v62 = vrot.slane %v36, 7
    %v65 = vrot.slane %v40, 6
    %v68 = vrot.slane %v44, 5
    %v71 = vrot.slane %v48, 4
    %v74 = vrot.slane %v52, 3
    %v77 = vrot.slane %v56, 2
    %v80 = vrot.slane %v60, 1
    %vm82 = vcmask 1040384
    %v83 = vsel %vm82, %v32, %v62
    %vm84 = vcmask 1041408
    %v85 = vsel %vm84, %v83, %v65
    %vm86 = vcmask 1042432
    %v87 = vsel %vm86, %v85, %v68
    %vm88 = vcmask 1043456
    %v89 = vsel %vm88, %v87, %v71
    %vm90 = vcmask 1044480
    %v91 = vsel %vm90, %v89, %v74
    %vm92 = vcmask 1045504
    %v93 = vsel %vm92, %v91, %v77
    %vm94 = vcmask 1046528
    %v95 = vsel %vm94, %v93, %v80
    %96 = vst [vmem:[#allocation7] sm:$0xff] %v95
    %s97 = sadd.s32 %s28, 8
    %s98 = sld [smem:[#allocation3 + %s97]]
    %s99 = scalar_lea.vmem [#allocation4], %s98
    %v100 = vld [vmem:[%s99] sm:$0x1]
    %s101 = sadd.s32 %s97, 1
    %s102 = sld [smem:[#allocation3 + %s101]]
    %s103 = scalar_lea.vmem [#allocation4], %s102
    %v104 = vld [vmem:[%s103] sm:$0x1]
    %s105 = sadd.s32 %s97, 2
    %s106 = sld [smem:[#allocation3 + %s105]]
    %s107 = scalar_lea.vmem [#allocation4], %s106
    %v108 = vld [vmem:[%s107] sm:$0x1]
    %s109 = sadd.s32 %s97, 3
    %s110 = sld [smem:[#allocation3 + %s109]]
    %s111 = scalar_lea.vmem [#allocation4], %s110
    %v112 = vld [vmem:[%s111] sm:$0x1]
    %s113 = sadd.s32 %s97, 4
    %s114 = sld [smem:[#allocation3 + %s113]]
    %s115 = scalar_lea.vmem [#allocation4], %s114
    %v116 = vld [vmem:[%s115] sm:$0x1]
    %s117 = sadd.s32 %s97, 5
    %s118 = sld [smem:[#allocation3 + %s117]]
    %s119 = scalar_lea.vmem [#allocation4], %s118
    %v120 = vld [vmem:[%s119] sm:$0x1]
    %s121 = sadd.s32 %s97, 6
    %s122 = sld [smem:[#allocation3 + %s121]]
    %s123 = scalar_lea.vmem [#allocation4], %s122
    %v124 = vld [vmem:[%s123] sm:$0x1]
    %s125 = sadd.s32 %s97, 7
    %s126 = sld [smem:[#allocation3 + %s125]]
    %s127 = scalar_lea.vmem [#allocation4], %s126
    %v128 = vld [vmem:[%s127] sm:$0x1]
    %v130 = vrot.slane %v104, 7
    %v133 = vrot.slane %v108, 6
    %v136 = vrot.slane %v112, 5
    %v139 = vrot.slane %v116, 4
    %v142 = vrot.slane %v120, 3
    %v145 = vrot.slane %v124, 2
    %v148 = vrot.slane %v128, 1
    %v150 = vsel %vm82, %v100, %v130
    %v151 = vsel %vm84, %v150, %v133
    %v152 = vsel %vm86, %v151, %v136
    %v153 = vsel %vm88, %v152, %v139
    %v154 = vsel %vm90, %v153, %v142
    %v155 = vsel %vm92, %v154, %v145
    %v156 = vsel %vm94, %v155, %v148
    %s157 = scalar_lea.vmem [#allocation7], 8
    %158 = vst [vmem:[%s157] sm:$0xff] %v156
    // Predicated region
    $region10: #{tpu_custom_call.1} parent=1 // pred_check
      _
    $region11: #{tpu_custom_call.1} parent=1 // pred_check_branch
      %160 = sbr.rel (0) target = $region13
    $region12: #{tpu_custom_call.1} parent=1 // pred_region
      %s162 = ssub.s32 256, 256
      %163 = vsyncadd [#allocation6], %s162
      %s164 = sshll.u32 [#allocation7], 4
      %s165 = int_to_ptr.vmem [resolvable:$true] %s164
      %170 = dma.vmem_to_hbm [thread:$0]  %s165, 256, %s2, [#allocation6], 128, 128, 8
    $region13: #{tpu_custom_call.1} parent=1 // pred_fallthru
      _
    // Predicated region
    $region14: #{tpu_custom_call.1} parent=1 // pred_check
      _
    $region15: #{tpu_custom_call.1} parent=1 // pred_check_branch
      %172 = sbr.rel (0) target = $region17
    $region16: #{tpu_custom_call.1} parent=1 // pred_region
      %173 = dma.done [#allocation6], 256
    $region17: #{tpu_custom_call.1} parent=1 // pred_fallthru
      _
    %174 = vsyncpa [#allocation5], 1
    %175 = vsyncpa [#allocation6], 1

</llo_original>
